<compile_context>
chip_gen: v7x
topology: tpu7x:2x2x1
jax: 0.10.0
libtpu: 0.0.40
codegen_flags: <defaults>
</compile_context>

<pallas_src>
import functools

import jax
import jax.numpy as jnp
from jax.experimental import pallas as pl
from jax.experimental.pallas import tpu as pltpu


_VMEM_LIMIT = 56 * 1024 * 1024        # <= v7x 64 MiB physical; fine on v5e/v6e


def _round_up(x, m):
    return (x + m - 1) // m * m


def _cdiv(a, b):
    return (a + b - 1) // b


# ---------------------------------------------------------------------------
# kernel_size == 1 (module default): both 1x1 convs fold into ONE matmul
#   y = (W2 @ W1) x + (W2 b1 + b2)   (exact: no nonlinearity in between)
# layout: channels on sublanes, flattened spatial on lanes (lane-dense).
# ---------------------------------------------------------------------------
def _pw_kernel(x_ref, w_ref, b_ref, o_ref):
    y = jnp.dot(w_ref[...], x_ref[0], preferred_element_type=jnp.float32)
    o_ref[0] = (y + b_ref[...]).astype(o_ref.dtype)


def _fused_pointwise(x, w1, b1, w2, b2, act_dtype):
    N, Cin, H, W = x.shape
    Cmid, Co = w1.shape[0], w2.shape[0]
    S = H * W
    dt = x.dtype if act_dtype is None else act_dtype

    # Fold conv2 o conv1 (both 1x1) into a single (Co, Cin) matmul + bias.
    w1m = w1.reshape(Cmid, Cin)
    w2m = w2.reshape(Co, Cmid)
    wf = jnp.dot(w2m, w1m)                     # (Co, Cin)
    bf = jnp.dot(w2m, b1) + b2                 # (Co,)

    # Large lane-dense spatial tile; no wrapper pad (Pallas masks the partial
    # last block's store, and garbage input lanes only affect masked lanes).
    TS = min(16384, _round_up(S, 128))
    if TS >= S:
        TS = S                                  # single full-extent block
    if N == 1 and _cdiv(S, TS) < 2 and S > 128:
        TS = _round_up(_cdiv(S, 2), 128)        # keep both v7x TCs busy
    grid = (N, _cdiv(S, TS))

    x3 = x.reshape(N, Cin, S).astype(dt)        # contiguous reshape, no copy
    itemsize = jnp.dtype(dt).itemsize
    flops = 2 * N * S * Cin * Co
    bytes_accessed = itemsize * N * S * (Cin + Co) + 4 * (Cin * Co + Co)

    out = pl.pallas_call(
        _pw_kernel,
        out_shape=jax.ShapeDtypeStruct((N, Co, S), dt),
        grid=grid,
        in_specs=[
            pl.BlockSpec((1, Cin, TS), lambda n, s: (n, 0, s)),
            pl.BlockSpec((Co, Cin), lambda n, s: (0, 0)),
            pl.BlockSpec((Co, 1), lambda n, s: (0, 0)),
        ],
        out_specs=pl.BlockSpec((1, Co, TS), lambda n, s: (n, 0, s)),
        compiler_params=pltpu.CompilerParams(
            dimension_semantics=("parallel", "parallel"),
            vmem_limit_bytes=_VMEM_LIMIT),
        cost_estimate=pl.CostEstimate(flops=int(flops), transcendentals=0,
                                      bytes_accessed=int(bytes_accessed)),
    )(x3, wf.astype(dt), bf.reshape(Co, 1).astype(jnp.float32))
    return out.reshape(N, Co, H, W)


# ---------------------------------------------------------------------------
# kernel_size > 1 (FADformer uses 3): fused kxk reflect-padded convs.
# layout: channels on sublanes, flattened H*W on lanes.  Per tap:
#   t = W_tap @ x  (MXU, contraction over channels), then the spatial shift
#   (with reflect boundaries) is applied to the small (Cout, S) result.
# ---------------------------------------------------------------------------
def _reflect_shift(t, r, c, ridx, cidx, H, W):
    """u[:, h*W + w] = t[:, reflH(h + r)*W + reflW(w + c)]  (PyTorch reflect)."""
    # --- row shift (sublane-row of the image, flat offset r*W) ---
    if r != 0:
        u = jnp.roll(t, -r * W, axis=1)
        bad_rows = range(H - r, H) if r > 0 else range(0, -r)
        for h0 in bad_rows:
            hs = h0 + r
            hr = 2 * (H - 1) - hs if hs >= H else -hs
            d = (h0 - hr) * W
            fix = t if d == 0 else jnp.roll(t, d, axis=1)
            u = jnp.where(ridx == h0, fix, u)
        t = u
    # --- column shift (flat offset c, boundary columns fixed per reflect) ---
    if c != 0:
        u = jnp.roll(t, -c, axis=1)
        bad_cols = range(W - c, W) if c > 0 else range(0, -c)
        for w0 in bad_cols:
            ws = w0 + c
            wr = 2 * (W - 1) - ws if ws >= W else -ws
            d = w0 - wr
            fix = t if d == 0 else jnp.roll(t, d, axis=1)
            u = jnp.where(cidx == w0, fix, u)
        t = u
    return t


def _kxk_kernel(x_ref, ridx_ref, cidx_ref, w1_ref, b1_ref, w2_ref, b2_ref,
                o_ref, *, k, H, W):
    p = k // 2
    S = H * W
    ridx = ridx_ref[...]                       # (1, S) int32: row index
    cidx = cidx_ref[...]                       # (1, S) int32: col index
    x = x_ref[0]                               # (Cin, S)
    Cmid = w1_ref.shape[1]
    Co = w2_ref.shape[1]

    def conv(z, w_ref_, b_ref_, cout):
        acc = jnp.zeros((cout, S), jnp.float32)
        for di in range(k):
            for dj in range(k):
                t = jnp.dot(w_ref_[di * k + dj], z,
                            preferred_element_type=jnp.float32)   # (cout, S)
                acc = acc + _reflect_shift(t, di - p, dj - p, ridx, cidx, H, W)
        return acc + b_ref_[...]

    h = conv(x, w1_ref, b1_ref, Cmid).astype(x.dtype)   # reflect handled per tap
    y = conv(h, w2_ref, b2_ref, Co)
    o_ref[0] = y.astype(o_ref.dtype)


def _fused_kxk(x, w1, b1, w2, b2, k, act_dtype):
    N, Cin, H, W = x.shape
    Cmid, Co = w1.shape[0], w2.shape[0]
    p = k // 2
    if H <= p or W <= p:
        raise ValueError("reflect padding requires H, W > kernel_size // 2")
    S = H * W
    dt = x.dtype if act_dtype is None else act_dtype

    x3 = x.reshape(N, Cin, S).astype(dt)       # channels-first, NO transposes
    w1t = jnp.transpose(w1, (2, 3, 0, 1)).reshape(k * k, Cmid, Cin).astype(dt)
    w2t = jnp.transpose(w2, (2, 3, 0, 1)).reshape(k * k, Co, Cmid).astype(dt)
    lin = jnp.arange(S, dtype=jnp.int32)
    ridx = (lin // W).reshape(1, S)
    cidx = (lin % W).reshape(1, S)

    itemsize = jnp.dtype(dt).itemsize
    flops = 2 * N * S * k * k * (Cin * Cmid + Cmid * Co)
    bytes_accessed = (itemsize * N * S * (Cin + Co) + 8 * S
                      + 4 * k * k * (Cin * Cmid + Cmid * Co) + 4 * (Cmid + Co))

    out = pl.pallas_call(
        functools.partial(_kxk_kernel, k=k, H=H, W=W),
        out_shape=jax.ShapeDtypeStruct((N, Co, S), dt),
        grid=(N,),
        in_specs=[
            pl.BlockSpec((1, Cin, S), lambda n: (n, 0, 0)),
            pl.BlockSpec((1, S), lambda n: (0, 0)),
            pl.BlockSpec((1, S), lambda n: (0, 0)),
            pl.BlockSpec((k * k, Cmid, Cin), lambda n: (0, 0, 0)),
            pl.BlockSpec((Cmid, 1), lambda n: (0, 0)),
            pl.BlockSpec((k * k, Co, Cmid), lambda n: (0, 0, 0)),
            pl.BlockSpec((Co, 1), lambda n: (0, 0)),
        ],
        out_specs=pl.BlockSpec((1, Co, S), lambda n: (n, 0, 0)),
        compiler_params=pltpu.CompilerParams(
            dimension_semantics=("parallel",),
            vmem_limit_bytes=_VMEM_LIMIT),
        cost_estimate=pl.CostEstimate(flops=int(flops), transcendentals=0,
                                      bytes_accessed=int(bytes_accessed)),
    )(x3, ridx, cidx, w1t, b1.reshape(Cmid, 1), w2t, b2.reshape(Co, 1))
    return out.reshape(N, Co, H, W)


# ---------------------------------------------------------------------------
# Module forward, reference, params
# ---------------------------------------------------------------------------
def patch_unembed_forward(x, params, kernel_size, activation_dtype=None):
    """proj(x): two chained reflect-padded convs (PatchUnEmbed.forward).

    activation_dtype: optional HBM storage dtype for activations (e.g.
    jnp.bfloat16) -- accumulation stays f32 on the MXU.  None keeps x.dtype.
    """
    w1, b1, w2, b2 = params["w1"], params["b1"], params["w2"], params["b2"]
    if w2.shape[1] != w1.shape[0]:
        raise ValueError("second conv in_channels must equal first conv "
                         "out_channels (the PyTorch module only composes when "
                         "patch_size == 1)")
    k = 1 if kernel_size is None else int(kernel_size)
    if k == 1:
        return _fused_pointwise(x, w1, b1, w2, b2, activation_dtype)
    return _fused_kxk(x, w1, b1, w2, b2, k, activation_dtype)


def _ref_forward(x, params, kernel_size):
    """Pure-JAX reference (lax conv) for correctness checking."""
    p = kernel_size // 2

    def conv(z, w, b):
        if p:
            z = jnp.pad(z, ((0, 0), (0, 0), (p, p), (p, p)), mode="reflect")
        y = jax.lax.conv_general_dilated(
            z, w, window_strides=(1, 1), padding="VALID",
            dimension_numbers=("NCHW", "OIHW", "NCHW"))
        return y + b.reshape(1, -1, 1, 1)

    return conv(conv(x, params["w1"], params["b1"]), params["w2"], params["b2"])


def init_params(key, embed_dim, out_chans, patch_size, kernel_size):
    k = 1 if kernel_size is None else kernel_size
    cmid = out_chans * patch_size ** 2
    k1, k2, k3, k4 = jax.random.split(key, 4)
    s1 = 1.0 / float(embed_dim * k * k) ** 0.5
    s2 = 1.0 / float(out_chans * k * k) ** 0.5
    return dict(
        w1=(s1 * jax.random.normal(k1, (cmid, embed_dim, k, k))).astype(jnp.float32),
        b1=(s1 * jax.random.normal(k2, (cmid,))).astype(jnp.float32),
        w2=(s2 * jax.random.normal(k3, (out_chans, out_chans, k, k))).astype(jnp.float32),
        b2=(s2 * jax.random.normal(k4, (out_chans,))).astype(jnp.float32),
    )


if __name__ == "__main__":
    key = jax.random.PRNGKey(0)
    kx, kp1, kp2 = jax.random.split(key, 3)
    N, embed_dim, out_chans, patch_size, H, W = 2, 32, 4, 1, 16, 16
    x = jax.random.normal(kx, (N, embed_dim, H, W), jnp.float32)   # NCHW

    fwd = jax.jit(patch_unembed_forward,
                  static_argnames=("kernel_size", "activation_dtype"))

    # Module default: kernel_size=None -> 1 (folded single pointwise matmul).
    p1 = init_params(kp1, embed_dim, out_chans, patch_size, None)
    y1 = fwd(x, p1, kernel_size=1)
    jax.block_until_ready(y1)
    r1 = _ref_forward(x, p1, 1)
    assert y1.shape == (N, out_chans, H, W)
    assert bool(jnp.all(jnp.isfinite(y1)))
    assert bool(jnp.allclose(y1, r1, atol=2e-2, rtol=2e-2))

    # FADformer-style usage: kernel_size=3 with reflect padding (fused kxk).
    p2 = init_params(kp2, embed_dim, out_chans, patch_size, 3)
    y2 = fwd(x, p2, kernel_size=3)
    jax.block_until_ready(y2)
    r2 = _ref_forward(x, p2, 3)
    assert y2.shape == (N, out_chans, H, W)
    assert bool(jnp.all(jnp.isfinite(y2)))
    assert bool(jnp.allclose(y2, r2, atol=2e-2, rtol=2e-2))

    # Optional bf16 activation storage (HBM-bandwidth saver, f32 accumulation).
    y1b = fwd(x, p1, kernel_size=1, activation_dtype=jnp.bfloat16)
    jax.block_until_ready(y1b)
    assert y1b.dtype == jnp.bfloat16
    assert bool(jnp.allclose(y1b.astype(jnp.float32), r1, atol=1e-1, rtol=1e-1))

    print("KERNEL_OK")
</pallas_src>

<mosaic_0001>
module attributes {stable_mosaic.version = 11 : i64} {
  func.func @_pw_kernel(%arg0: i32, %arg1: i32, %arg2: memref<1x32x256xf32, #tpu.memory_space<vmem>>, %arg3: memref<4x32xf32, #tpu.memory_space<vmem>>, %arg4: memref<4x1xf32, #tpu.memory_space<vmem>>, %arg5: memref<1x4x256xf32, #tpu.memory_space<vmem>>) attributes {dimension_semantics = [#tpu.dimension_semantics<parallel>, #tpu.dimension_semantics<parallel>], iteration_bounds = array<i64: 2, 1>, scalar_prefetch = 0 : i64, scratch_operands = 0 : i64, tpu.core_type = #tpu.core_type<tc>, window_params = [{transform_indices = @transform_0, window_bounds = array<i64: 1, 32, 256>}, {pipeline_mode = #tpu.pipeline_mode<synchronous>, transform_indices = @transform_1, window_bounds = array<i64: 4, 32>}, {pipeline_mode = #tpu.pipeline_mode<synchronous>, transform_indices = @transform_2, window_bounds = array<i64: 4, 1>}, {transform_indices = @transform_3, window_bounds = array<i64: 1, 4, 256>}]} {
    %c0 = arith.constant 0 : index
    %c0_0 = arith.constant 0 : index
    %0 = vector.load %arg3[%c0, %c0_0] : memref<4x32xf32, #tpu.memory_space<vmem>>, vector<4x32xf32>
    %c0_1 = arith.constant 0 : index
    %c0_2 = arith.constant 0 : index
    %c0_3 = arith.constant 0 : index
    %1 = vector.load %arg2[%c0_1, %c0_2, %c0_3] : memref<1x32x256xf32, #tpu.memory_space<vmem>>, vector<1x32x256xf32>
    %2 = vector.shape_cast %1 : vector<1x32x256xf32> to vector<32x256xf32>
    %cst = arith.constant dense<0.000000e+00> : vector<4x256xf32>
    %3 = tpu.matmul %0, %2, %cst {dimension_numbers = #tpu.dot_dimension_numbers<[1], [0], [0], [1], [0, 0, 1, 1], [], []>} : vector<4x32xf32>, vector<32x256xf32>, vector<4x256xf32> -> vector<4x256xf32>
    %c0_4 = arith.constant 0 : index
    %c0_5 = arith.constant 0 : index
    %4 = vector.load %arg4[%c0_4, %c0_5] : memref<4x1xf32, #tpu.memory_space<vmem>>, vector<4x1xf32>
    %5 = vector.broadcast %4 : vector<4x1xf32> to vector<4x256xf32>
    %6 = arith.addf %3, %5 : vector<4x256xf32>
    %c0_6 = arith.constant 0 : index
    %c0_7 = arith.constant 0 : index
    %c0_8 = arith.constant 0 : index
    %7 = vector.load %arg5[%c0_6, %c0_7, %c0_8] : memref<1x4x256xf32, #tpu.memory_space<vmem>>, vector<1x4x256xf32>
    %8 = vector.shape_cast %7 : vector<1x4x256xf32> to vector<4x256xf32>
    %9 = vector.shape_cast %6 : vector<4x256xf32> to vector<1x4x256xf32>
    tpu.vector_store %arg5[%c0_6, %c0_7, %c0_8], %9 {strides = array<i32>} : memref<1x4x256xf32, #tpu.memory_space<vmem>>, vector<1x4x256xf32>,
    return
  }
  func.func @transform_0(%arg0: i32, %arg1: i32) -> (i32, i32, i32) {
    %c0_i32 = arith.constant 0 : i32
    %c0_i32_0 = arith.constant 0 : i32
    return %arg0, %c0_i32, %arg1 : i32, i32, i32
  }
  func.func @transform_1(%arg0: i32, %arg1: i32) -> (i32, i32) {
    %c0_i32 = arith.constant 0 : i32
    %c0_i32_0 = arith.constant 0 : i32
    %c0_i32_1 = arith.constant 0 : i32
    return %c0_i32, %c0_i32_0 : i32, i32
  }
  func.func @transform_2(%arg0: i32, %arg1: i32) -> (i32, i32) {
    %c0_i32 = arith.constant 0 : i32
    %c0_i32_0 = arith.constant 0 : i32
    %c0_i32_1 = arith.constant 0 : i32
    return %c0_i32, %c0_i32_0 : i32, i32
  }
  func.func @transform_3(%arg0: i32, %arg1: i32) -> (i32, i32, i32) {
    %c0_i32 = arith.constant 0 : i32
    %c0_i32_0 = arith.constant 0 : i32
    return %arg0, %c0_i32, %arg1 : i32, i32, i32
  }
}

</mosaic_0001>

<llo_original>
// kernel: patch_unembed_forward.1
$region0: #{patch_unembed_forward.1}
  #allocation0 [shape = 'u32[]', space=smem, size = 0x4, offset = 0x4, fixed_abs, tag = 'smem constant byte address 0x4 - core index']
  #allocation1 [shape = 'u32[144,128]{1,0:T(1,128)}', space=vmem, size = 0x12000, scoped, tag = 'internal scratch']
  %s0 = inlined_call_operand.vmem [shape: f32[2,32,256], index: 0, kind: input, shape index: {}]
  %s1 = inlined_call_operand.vmem [shape: f32[4,32], index: 1, kind: input, shape index: {}]
  %s2 = inlined_call_operand.vmem [shape: f32[4,1], index: 2, kind: input, shape index: {}]
  %s3 = inlined_call_operand.vmem [shape: f32[2,4,256], index: 3, kind: output, shape index: {}]
  %s4 = sld [smem:[#allocation0]]
  $region45: #{patch_unembed_forward.1} parent=0
    _
  %s6 = ssub.s32 1, %s4
  %s7 = scalar_select 0, %s6, %s4
  loop: start=0, step=1, limit=4
  $region2: #{patch_unembed_forward.1} parent=0 // loop_pre_header
    _
  $region3: #{patch_unembed_forward.1} parent=0 // loop_header
    %s9 = sphi 0, %s13
    %p10 = scmp.ge.s32.totalorder %s9, 4
    %s16 = sphi 0, %s28
    %s17 = sphi 0, %s24
    %s18 = sphi 0, %s16
    %s19 = sphi 0, %s17
    %s20 = sphi 0, %s18
    %s21 = sphi 0, %s19
    %s33 = sphi 0, %s35
    %s36 = sphi 0, %s33
    %s37 = sphi 0, %s36
    %s53 = sphi 0, %s37
    %s57 = sphi 0, %s57
    %s59 = sphi 0, %s57
    %s60 = sphi 0, %s59
    %s74 = sphi 0, %s60
    %s78 = sphi 0, %s78
    %s80 = sphi 0, %s78
    %s81 = sphi 0, %s80
    %s95 = sphi 0, %s81
    %s103 = sphi 0, %s105
    %s106 = sphi 0, %s103
    %s107 = sphi 0, %s106
    %s123 = sphi 0, %s107
  $region4: #{patch_unembed_forward.1} parent=0 // loop_header_branch
    %12 = sbr.rel (%p10) target = $region8
  $region5: #{patch_unembed_forward.1} parent=0 // loop_body
    %s14 = ssub.s32 %s9, 1
    %s15 = ssub.s32 %s9, 2
    %s22 = sadd.s32 1, %s17
    %p23 = scmp.ge.s32.totalorder %s22, 1
    %s24 = scalar_select %p23, 0, %s22
    %s25 = sadd.s32 1, %s16
    %s26 = scalar_select %p23, %s25, %s16
    %p27 = scmp.ge.s32.totalorder %s26, 2
    %s28 = scalar_select %p27, 0, %s26
    %s29 = ssub.s32 %s16, %s28
    %s30 = ssub.s32 %s17, %s24
    %s31 = sor.u32 %s29, %s30
    %p32 = scmp.eq.s32.totalorder %s31, 0
    %s34 = sadd.s32 %s33, 1
    %s35 = scalar_select %p32, %s33, %s34
    %p38 = pneg %p32
    %p39 = scmp.eq.s32.totalorder %s9, 1
    %p40 = por %p38, %p39
    %p41 = scmp.ne.s32.totalorder %s33, %s36
    %p42 = scmp.eq.s32.totalorder %s9, 0
    %p43 = por %p41, %p42
    %p44 = scmp.ne.s32.totalorder %s33, %s36
    %p45 = scmp.eq.s32.totalorder %s14, 1
    %p46 = por %p44, %p45
    %p47 = scmp.ne.s32.totalorder %s36, %s37
    %p48 = scmp.eq.s32.totalorder %s14, 0
    %p49 = por %p47, %p48
    %p50 = scmp.ne.s32.totalorder %s36, %s37
    %p51 = scmp.eq.s32.totalorder %s15, 1
    %p52 = por %p50, %p51
    %p54 = scmp.ne.s32.totalorder %s37, %s53
    %p55 = scmp.eq.s32.totalorder %s15, 0
    %p56 = por %p54, %p55
    %s58 = sadd.s32 %s57, 1
    %p61 = scmp.eq.s32.totalorder %s9, 1
    %p62 = scmp.ne.s32.totalorder %s57, %s59
    %p63 = scmp.eq.s32.totalorder %s9, 0
    %p64 = por %p62, %p63
    %p65 = scmp.ne.s32.totalorder %s57, %s59
    %p66 = scmp.eq.s32.totalorder %s14, 1
    %p67 = por %p65, %p66
    %p68 = scmp.ne.s32.totalorder %s59, %s60
    %p69 = scmp.eq.s32.totalorder %s14, 0
    %p70 = por %p68, %p69
    %p71 = scmp.ne.s32.totalorder %s59, %s60
    %p72 = scmp.eq.s32.totalorder %s15, 1
    %p73 = por %p71, %p72
    %p75 = scmp.ne.s32.totalorder %s60, %s74
    %p76 = scmp.eq.s32.totalorder %s15, 0
    %p77 = por %p75, %p76
    %s79 = sadd.s32 %s78, 1
    %p82 = scmp.eq.s32.totalorder %s9, 1
    %p83 = scmp.ne.s32.totalorder %s78, %s80
    %p84 = scmp.eq.s32.totalorder %s9, 0
    %p85 = por %p83, %p84
    %p86 = scmp.ne.s32.totalorder %s78, %s80
    %p87 = scmp.eq.s32.totalorder %s14, 1
    %p88 = por %p86, %p87
    %p89 = scmp.ne.s32.totalorder %s80, %s81
    %p90 = scmp.eq.s32.totalorder %s14, 0
    %p91 = por %p89, %p90
    %p92 = scmp.ne.s32.totalorder %s80, %s81
    %p93 = scmp.eq.s32.totalorder %s15, 1
    %p94 = por %p92, %p93
    %p96 = scmp.ne.s32.totalorder %s81, %s95
    %p97 = scmp.eq.s32.totalorder %s15, 0
    %p98 = por %p96, %p97
    %s99 = ssub.s32 %s16, %s28
    %s100 = ssub.s32 %s17, %s24
    %s101 = sor.u32 %s99, %s100
    %p102 = scmp.eq.s32.totalorder %s101, 0
    %s104 = sadd.s32 %s103, 1
    %s105 = scalar_select %p102, %s103, %s104
    %p108 = pneg %p102
    %p109 = scmp.eq.s32.totalorder %s9, 1
    %p110 = por %p108, %p109
    %p111 = scmp.ne.s32.totalorder %s103, %s106
    %p112 = scmp.eq.s32.totalorder %s9, 0
    %p113 = por %p111, %p112
    %p114 = scmp.ne.s32.totalorder %s103, %s106
    %p115 = scmp.eq.s32.totalorder %s14, 1
    %p116 = por %p114, %p115
    %p117 = scmp.ne.s32.totalorder %s106, %s107
    %p118 = scmp.eq.s32.totalorder %s14, 0
    %p119 = por %p117, %p118
    %p120 = scmp.ne.s32.totalorder %s106, %s107
    %p121 = scmp.eq.s32.totalorder %s15, 1
    %p122 = por %p120, %p121
    %p124 = scmp.ne.s32.totalorder %s107, %s123
    %p125 = scmp.eq.s32.totalorder %s15, 0
    %p126 = por %p124, %p125
    %p127 = scmp.le.s32.totalorder 1, %s9
    %p128 = scmp.lt.s32.totalorder %s9, 3
    %p129 = pnand %p127, %p128
    %p130 = pneg %p129
    // Predicated region
    $region9: #{patch_unembed_forward.1} parent=5 // pred_check
      _
    $region10: #{patch_unembed_forward.1} parent=5 // pred_check_branch
      %132 = sbr.rel (%p129) target = $region12
    $region11: #{patch_unembed_forward.1} parent=5 // pred_region
      %s133 = ssub.s32 %s9, 1
      // Predicated region
      $region13: #{patch_unembed_forward.1} parent=11 // pred_check
        %p134 = pneg %p70
      $region14: #{patch_unembed_forward.1} parent=11 // pred_check_branch
        %136 = sbr.rel (%p134) target = $region16
      $region15: #{patch_unembed_forward.1} parent=11 // pred_region
        _
      $region16: #{patch_unembed_forward.1} parent=11 // pred_fallthru
        _
      // Predicated region
      $region17: #{patch_unembed_forward.1} parent=11 // pred_check
        %p137 = pneg %p91
      $region18: #{patch_unembed_forward.1} parent=11 // pred_check_branch
        %139 = sbr.rel (%p137) target = $region20
      $region19: #{patch_unembed_forward.1} parent=11 // pred_region
        _
      $region20: #{patch_unembed_forward.1} parent=11 // pred_fallthru
        _
    $region12: #{patch_unembed_forward.1} parent=5 // pred_fallthru
      _
    %p140 = scmp.lt.s32.totalorder %s9, 2
    // Predicated region
    $region21: #{patch_unembed_forward.1} parent=5 // pred_check
      %p141 = pneg %p140
    $region22: #{patch_unembed_forward.1} parent=5 // pred_check_branch
      %143 = sbr.rel (%p141) target = $region24
    $region23: #{patch_unembed_forward.1} parent=5 // pred_region
      // Predicated region
      $region25: #{patch_unembed_forward.1} parent=23 // pred_check
        %p144 = pneg %p43
      $region26: #{patch_unembed_forward.1} parent=23 // pred_check_branch
        %146 = sbr.rel (%p144) target = $region28
      $region27: #{patch_unembed_forward.1} parent=23 // pred_region
        %s147 = smul.u32 2, %s17
        %p148 = scmp.lt.s32.totalorder %s16, 1
        %s149 = scalar_select %p148, %s16, 1
        %p150 = scmp.lt.s32.totalorder %s147, 1
        %s151 = scalar_select %p150, %s147, 1
        %s152 = smul.addr %s149, 8
        %s153 = sadd.s32 %s151, %s152
        %s154 = smul.addr %s153, 8
        %s155 = scalar_lea.vmem %s0, %s154
        %s156 = smul.u32 2, %s17
      $region28: #{patch_unembed_forward.1} parent=23 // pred_fallthru
        _
    $region24: #{patch_unembed_forward.1} parent=5 // pred_fallthru
      _
    %p157 = scmp.le.s32.totalorder 1, %s9
    %p158 = scmp.lt.s32.totalorder %s9, 3
    %p159 = pnand %p157, %p158
    %p160 = pneg %p159
    // Predicated region
    $region29: #{patch_unembed_forward.1} parent=5 // pred_check
      _
    $region30: #{patch_unembed_forward.1} parent=5 // pred_check_branch
      %162 = sbr.rel (%p159) target = $region32
    $region31: #{patch_unembed_forward.1} parent=5 // pred_region
      %s163 = ssub.s32 %s9, 1
      %s164 = smul.u32 2, %s19
      %p165 = scmp.lt.s32.totalorder %s18, 1
      %s166 = scalar_select %p165, %s18, 1
      %p167 = scmp.lt.s32.totalorder %s164, 1
      %s168 = scalar_select %p167, %s164, 1
      %s169 = smul.addr %s166, 8
      %s170 = sadd.s32 %s168, %s169
      %s171 = smul.addr %s170, 8
      %s172 = scalar_lea.vmem %s0, %s171
      %p173 = pneg %p49
      %p174 = pneg %p46
      %p175 = pneg %p70
      %p176 = pneg %p67
      %p177 = pneg %p91
      %p178 = pneg %p88
      %p179 = pneg %p119
      %p180 = pneg %p116
      %s181 = smul.u32 2, %s19
      %p182 = scmp.lt.s32.totalorder %s18, 1
      %s183 = scalar_select %p182, %s18, 1
      %p184 = scmp.lt.s32.totalorder %s181, 1
      %s185 = scalar_select %p184, %s181, 1
      %s186 = smul.addr %s183, 2
      %s187 = sadd.s32 %s185, %s186
      %s188 = smul.addr %s187, 4
      %s189 = scalar_lea.vmem %s3, %s188
      %s190 = smul.u32 2, %s19
      %p191 = scmp.lt.s32.totalorder %s18, 1
      %s192 = scalar_select %p191, %s18, 1
      %p193 = scmp.lt.s32.totalorder %s190, 1
      %s194 = scalar_select %p193, %s190, 1
      %s195 = smul.addr %s192, 8
      %s196 = sadd.s32 %s194, %s195
      %s197 = smul.addr %s196, 8
      %s198 = scalar_lea.vmem %s0, %s197
      %s199 = smul.u32 2, %s19
      %s200 = smul.u32 2, %s19
      %p201 = scmp.lt.s32.totalorder %s18, 1
      %s202 = scalar_select %p201, %s18, 1
      %p203 = scmp.lt.s32.totalorder %s200, 1
      %s204 = scalar_select %p203, %s200, 1
      %s205 = smul.addr %s202, 2
      %s206 = sadd.s32 %s204, %s205
      %s207 = smul.addr %s206, 4
      %s208 = scalar_lea.vmem %s3, %s207
      %s209 = smul.u32 2, %s19
      %v210 = vld [vmem:[%s1] sm:$0xf]
      %v211 = vld [vmem:[%s198] sm:$0xff]
      %v212 = vld [vmem:[%s198 + $0x8] sm:$0xff]
      %v213 = vld [vmem:[%s198 + $0x10] sm:$0xff]
      %v214 = vld [vmem:[%s198 + $0x18] sm:$0xff]
      %v215 = vld [vmem:[%s198 + $0x20] sm:$0xff]
      %v216 = vld [vmem:[%s198 + $0x28] sm:$0xff]
      %v217 = vld [vmem:[%s198 + $0x30] sm:$0xff]
      %v218 = vld [vmem:[%s198 + $0x38] sm:$0xff]
      %v219 = vld [vmem:[%s2] sm:$0xf]
      %221 = vset.pattern.permute.xlu0 0
      %222 = vperm.xlu0 %221, %v219
      %v223 = vpop.permute.xlu0 %222
      %vm225 = vcmask 261120
      %v227 = vsel %vm225, %v210, 0
      %229 = vmatprep.subr.mxu0 %v212
      %230 = vmatpush1.msra.mxu0 %v211
      %231 = vmatprep.subr.mxu0 %v214
      %232 = vmatpush1.msra.mxu0 %v213
      %233 = vmatprep.subr.mxu0 %v216
      %234 = vmatpush1.msra.mxu0 %v215
      %235 = vmatprep.subr.mxu0 %v218
      %236 = vmatpush1.msra.mxu0 %v217
      %237 = vmatprep.subr.mxu0 0.0
      %238 = vmatpush1.msra.mxu0 0.0
      %239 = vmatprep.subr.mxu0 0.0
      %240 = vmatpush1.msra.mxu0 0.0
      %241 = vmatprep.subr.mxu0 0.0
      %242 = vmatpush1.msra.mxu0 0.0
      %243 = vmatprep.subr.mxu0 0.0
      %244 = vmatpush1.msra.mxu0 0.0
      %245 = vmatprep.subr.mxu0 0.0
      %246 = vmatpush1.msra.mxu0 0.0
      %247 = vmatprep.subr.mxu0 0.0
      %248 = vmatpush1.msra.mxu0 0.0
      %249 = vmatprep.subr.mxu0 0.0
      %250 = vmatpush1.msra.mxu0 0.0
      %251 = vmatprep.subr.mxu0 0.0
      %252 = vmatpush1.msra.mxu0 0.0
      %253 = vmatprep.subr.mxu0 0.0
      %254 = vmatpush1.msra.mxu0 0.0
      %255 = vmatprep.subr.mxu0 0.0
      %256 = vmatpush1.msra.mxu0 0.0
      %257 = vmatprep.subr.mxu0 0.0
      %258 = vmatpush1.msra.mxu0 0.0
      %259 = vmatprep.subr.mxu0 0.0
      %260 = vmatpush1.msra.mxu0 0.0
      %261 = vmatprep.subr.mxu0 0.0
      %262 = vmatpush1.msra.mxu0 0.0
      %263 = vmatprep.subr.mxu0 0.0
      %264 = vmatpush1.msra.mxu0 0.0
      %265 = vmatprep.subr.mxu0 0.0
      %266 = vmatpush1.msra.mxu0 0.0
      %267 = vmatprep.subr.mxu0 0.0
      %268 = vmatpush1.msra.mxu0 0.0
      %269 = vmatprep.subr.mxu0 0.0
      %270 = vmatpush1.msra.mxu0 0.0
      %271 = vmatprep.subr.mxu0 0.0
      %272 = vmatpush1.msra.mxu0 0.0
      %273 = vmatprep.subr.mxu0 0.0
      %274 = vmatpush1.msra.mxu0 0.0
      %275 = vmatprep.subr.mxu0 0.0
      %276 = vmatpush1.msra.mxu0 0.0
      %277 = vmatprep.subr.mxu0 0.0
      %278 = vmatpush1.msra.mxu0 0.0
      %279 = vmatprep.subr.mxu0 0.0
      %280 = vmatpush1.msra.mxu0 0.0
      %281 = vmatprep.subr.mxu0 0.0
      %282 = vmatpush1.msra.mxu0 0.0
      %283 = vmatprep.subr.mxu0 0.0
      %284 = vmatpush1.msra.mxu0 0.0
      %285 = vmatprep.subr.mxu0 0.0
      %286 = vmatpush1.msra.mxu0 0.0
      %287 = vmatprep.subr.mxu0 0.0
      %288 = vmatpush1.msra.mxu0 0.0
      %289 = vmatprep.subr.mxu0 0.0
      %290 = vmatpush1.msra.mxu0 0.0
      %291 = vmatprep.subr.mxu0 0.0
      %292 = vmatpush1.msra.mxu0 0.0
      %293 = vmatprep.mubr.f32.mxu0 0.0
      %294 = vmatmul.mubr.f32.gmra.mrb[0].mxu0 %v227
      %v295 = vpop.f32.mrb[0].mxu0
      %v296 = vadd.f32 %v223, %v295
      %v297 = vpop.f32.mrb[0].mxu0
      %v298 = vadd.f32 %v223, %v297
      %299 = vdwg.mxu0
      %v302 = vcombine.low %v296, %v298
      %304 = vst [vmem:[%s208] sm:$0xff] %v302
      %s305 = smul.u32 2, %s19
      %p306 = scmp.lt.s32.totalorder %s18, 1
      %s307 = scalar_select %p306, %s18, 1
      %p308 = scmp.lt.s32.totalorder %s305, 1
      %s309 = scalar_select %p308, %s305, 1
      %s310 = smul.addr %s307, 2
      %s311 = sadd.s32 %s309, %s310
      %s312 = smul.addr %s311, 4
      %s313 = scalar_lea.vmem %s3, %s312
      // Predicated region
      $region33: #{patch_unembed_forward.1} parent=31 // pred_check
        %p314 = pneg %p116
      $region34: #{patch_unembed_forward.1} parent=31 // pred_check_branch
        %316 = sbr.rel (%p314) target = $region36
      $region35: #{patch_unembed_forward.1} parent=31 // pred_region
        %s317 = smul.u32 2, %s19
      $region36: #{patch_unembed_forward.1} parent=31 // pred_fallthru
        _
    $region32: #{patch_unembed_forward.1} parent=5 // pred_fallthru
      _
    %p318 = scmp.le.s32.totalorder 2, %s9
    // Predicated region
    $region37: #{patch_unembed_forward.1} parent=5 // pred_check
      %p319 = pneg %p318
    $region38: #{patch_unembed_forward.1} parent=5 // pred_check_branch
      %321 = sbr.rel (%p319) target = $region40
    $region39: #{patch_unembed_forward.1} parent=5 // pred_region
      %s322 = ssub.s32 %s9, 2
      // Predicated region
      $region41: #{patch_unembed_forward.1} parent=39 // pred_check
        %p323 = pneg %p122
      $region42: #{patch_unembed_forward.1} parent=39 // pred_check_branch
        %325 = sbr.rel (%p323) target = $region44
      $region43: #{patch_unembed_forward.1} parent=39 // pred_region
        %s326 = smul.u32 2, %s21
        %p327 = scmp.lt.s32.totalorder %s20, 1
        %s328 = scalar_select %p327, %s20, 1
        %p329 = scmp.lt.s32.totalorder %s326, 1
        %s330 = scalar_select %p329, %s326, 1
        %s331 = smul.addr %s328, 2
        %s332 = sadd.s32 %s330, %s331
        %s333 = smul.addr %s332, 4
        %s334 = scalar_lea.vmem %s3, %s333
      $region44: #{patch_unembed_forward.1} parent=39 // pred_fallthru
        _
    $region40: #{patch_unembed_forward.1} parent=5 // pred_fallthru
      _
  $region6: #{patch_unembed_forward.1} parent=0 // loop_footer
    %s13 = sadd.s32 1, %s9
  $region7: #{patch_unembed_forward.1} parent=0 // loop_footer_branch
    %8 = sbr.rel target = $region3
  $region8: #{patch_unembed_forward.1} parent=0 // loop_exit
    _

</llo_original>
